<compile_context>
chip_gen: v5e
topology: v5e:2x2
jax: 0.10.0
libtpu: 0.0.40
codegen_flags: <defaults>
</compile_context>

<pallas_src>
import functools

import jax
import jax.numpy as jnp
from jax.experimental import pallas as pl
from jax.experimental.pallas import tpu as pltpu

LANE = 128      # lane width (last-dim pad granularity)
SUBLANE = 8     # sublane width (second-to-last-dim pad granularity)


def _round_up(n: int, m: int) -> int:
    return ((n + m - 1) // m) * m


def mlp_kernel(x_ref, w1_ref, b1_ref, w2_ref, b2_ref, o_ref):
    # Hot path: two bf16 MXU matmuls with f32 accumulation; bias + ReLU on VPU.
    x = x_ref[...]                                           # (TM, K) bf16
    h = jnp.dot(x, w1_ref[...], preferred_element_type=jnp.float32)
    h = jnp.maximum(h + b1_ref[...], 0.0)                    # f32 bias + ReLU
    y = jnp.dot(h.astype(jnp.bfloat16), w2_ref[...],
                preferred_element_type=jnp.float32)
    o_ref[...] = (y + b2_ref[...]).astype(o_ref.dtype)


@functools.partial(jax.jit, static_argnames=("tm",))
def network_forward(x, w1, b1, w2, b2, *, tm=512):
    """Pallas equivalent of Network.forward.

    x:  (B, input_size) float32
    w1: (input_size, 50), b1: (1, 50)         (transpose of nn.Linear.weight)
    w2: (50, output_size), b2: (1, output_size)
    returns (B, output_size) float32
    """
    B, K = x.shape
    H = w1.shape[1]
    N = w2.shape[1]
    H_pad = _round_up(H, LANE)
    N_pad = _round_up(N, LANE)

    # --- wrapper-side padding / casting (zeros through ReLU contribute 0) ---
    w1p = jnp.zeros((K, H_pad), jnp.bfloat16).at[:, :H].set(w1.astype(jnp.bfloat16))
    b1p = jnp.zeros((1, H_pad), jnp.float32).at[:, :H].set(b1)
    w2p = jnp.zeros((H_pad, N_pad), jnp.bfloat16).at[:H, :N].set(w2.astype(jnp.bfloat16))
    b2p = jnp.zeros((1, N_pad), jnp.float32).at[:, :N].set(b2)

    # Batch tiling: pad B up to a sublane multiple, then split into TM-row
    # tiles (TM itself is a sublane multiple, so tiles are never ragged).
    B8 = _round_up(B, SUBLANE)
    TM = B8 if B8 < tm else tm
    B_pad = _round_up(B8, TM)
    xb = x.astype(jnp.bfloat16)
    if B_pad != B:
        xb = jnp.pad(xb, ((0, B_pad - B), (0, 0)))
    grid = (B_pad // TM,)

    flops = 2 * B_pad * (K * H_pad + H_pad * N_pad)
    bytes_accessed = (
        xb.size * 2 + w1p.size * 2 + w2p.size * 2
        + b1p.size * 4 + b2p.size * 4 + B_pad * N_pad * 4
    )

    out = pl.pallas_call(
        mlp_kernel,
        out_shape=jax.ShapeDtypeStruct((B_pad, N_pad), jnp.float32),
        grid_spec=pltpu.PrefetchScalarGridSpec(
            num_scalar_prefetch=0,
            grid=grid,
            in_specs=[
                pl.BlockSpec((TM, K), lambda i: (i, 0)),         # x: batch-tiled
                pl.BlockSpec((K, H_pad), lambda i: (0, 0)),      # w1: resident
                pl.BlockSpec((1, H_pad), lambda i: (0, 0)),      # b1: resident
                pl.BlockSpec((H_pad, N_pad), lambda i: (0, 0)),  # w2: resident
                pl.BlockSpec((1, N_pad), lambda i: (0, 0)),      # b2: resident
            ],
            out_specs=pl.BlockSpec((TM, N_pad), lambda i: (i, 0)),
        ),
        compiler_params=pltpu.CompilerParams(
            # Batch tiles are independent -> shard across the 2 TCs on v7x.
            dimension_semantics=("parallel",),
        ),
        cost_estimate=pl.CostEstimate(
            flops=flops, transcendentals=0, bytes_accessed=bytes_accessed
        ),
    )(xb, w1p, b1p, w2p, b2p)

    # Logical slice back to the unpadded problem size.
    return out[:B, :N]


def init_params(key, input_size, output_size, hidden=50):
    """Deterministic synthetic parameters matching nn.Linear shapes."""
    k1, k2, k3, k4 = jax.random.split(key, 4)
    # PyTorch nn.Linear weight is (out, in); we store the transpose (in, out).
    w1 = jax.random.normal(k1, (input_size, hidden), jnp.float32) * 0.1
    b1 = jax.random.normal(k2, (1, hidden), jnp.float32) * 0.1
    w2 = jax.random.normal(k3, (hidden, output_size), jnp.float32) * 0.1
    b2 = jax.random.normal(k4, (1, output_size), jnp.float32) * 0.1
    return w1, b1, w2, b2


if __name__ == "__main__":
    key = jax.random.PRNGKey(0)
    kx, kp = jax.random.split(key)

    batch = 8
    input_size = 32
    output_size = 10

    x = jax.random.normal(kx, (batch, input_size), jnp.float32)
    w1, b1, w2, b2 = init_params(kp, input_size, output_size)

    out = network_forward(x, w1, b1, w2, b2)
    out = jax.block_until_ready(out)

    # Reference with the same bf16-input / f32-accumulate math as the kernel.
    h = jnp.dot(x.astype(jnp.bfloat16), w1.astype(jnp.bfloat16),
                preferred_element_type=jnp.float32) + b1
    h = jnp.maximum(h, 0.0)
    ref = jnp.dot(h.astype(jnp.bfloat16), w2.astype(jnp.bfloat16),
                  preferred_element_type=jnp.float32) + b2

    assert out.shape == (batch, output_size)
    assert jnp.allclose(out, ref, atol=1e-2, rtol=1e-2)

    print("KERNEL_OK")
</pallas_src>

<mosaic_0001>
module attributes {stable_mosaic.version = 11 : i64} {
  func.func @mlp_kernel(%arg0: i32, %arg1: memref<8x32xbf16, #tpu.memory_space<vmem>>, %arg2: memref<32x128xbf16, #tpu.memory_space<vmem>>, %arg3: memref<1x128xf32, #tpu.memory_space<vmem>>, %arg4: memref<128x128xbf16, #tpu.memory_space<vmem>>, %arg5: memref<1x128xf32, #tpu.memory_space<vmem>>, %arg6: memref<8x128xf32, #tpu.memory_space<vmem>>) attributes {dimension_semantics = [#tpu.dimension_semantics<parallel>], iteration_bounds = array<i64: 1>, scalar_prefetch = 0 : i64, scratch_operands = 0 : i64, tpu.core_type = #tpu.core_type<tc>, window_params = [{transform_indices = @transform_0, window_bounds = array<i64: 8, 32>}, {pipeline_mode = #tpu.pipeline_mode<synchronous>, transform_indices = @transform_1, window_bounds = array<i64: 32, 128>}, {pipeline_mode = #tpu.pipeline_mode<synchronous>, transform_indices = @transform_2, window_bounds = array<i64: 1, 128>}, {pipeline_mode = #tpu.pipeline_mode<synchronous>, transform_indices = @transform_3, window_bounds = array<i64: 128, 128>}, {pipeline_mode = #tpu.pipeline_mode<synchronous>, transform_indices = @transform_4, window_bounds = array<i64: 1, 128>}, {transform_indices = @transform_5, window_bounds = array<i64: 8, 128>}]} {
    %c0 = arith.constant 0 : index
    %c0_0 = arith.constant 0 : index
    %0 = vector.load %arg1[%c0, %c0_0] : memref<8x32xbf16, #tpu.memory_space<vmem>>, vector<8x32xbf16>
    %c0_1 = arith.constant 0 : index
    %c0_2 = arith.constant 0 : index
    %1 = vector.load %arg2[%c0_1, %c0_2] : memref<32x128xbf16, #tpu.memory_space<vmem>>, vector<32x128xbf16>
    %cst = arith.constant dense<0.000000e+00> : vector<8x128xf32>
    %2 = tpu.matmul %0, %1, %cst {dimension_numbers = #tpu.dot_dimension_numbers<[1], [0], [0], [1], [0, 0, 1, 1], [], []>} : vector<8x32xbf16>, vector<32x128xbf16>, vector<8x128xf32> -> vector<8x128xf32>
    %c0_3 = arith.constant 0 : index
    %c0_4 = arith.constant 0 : index
    %3 = vector.load %arg3[%c0_3, %c0_4] : memref<1x128xf32, #tpu.memory_space<vmem>>, vector<1x128xf32>
    %4 = vector.broadcast %3 : vector<1x128xf32> to vector<8x128xf32>
    %5 = arith.addf %2, %4 : vector<8x128xf32>
    %cst_5 = arith.constant 0.000000e+00 : f32
    %6 = vector.broadcast %cst_5 : f32 to vector<8x128xf32>
    %7 = arith.maximumf %5, %6 : vector<8x128xf32>
    %8 = arith.truncf %7 : vector<8x128xf32> to vector<8x128xbf16>
    %c0_6 = arith.constant 0 : index
    %c0_7 = arith.constant 0 : index
    %9 = vector.load %arg4[%c0_6, %c0_7] : memref<128x128xbf16, #tpu.memory_space<vmem>>, vector<128x128xbf16>
    %cst_8 = arith.constant dense<0.000000e+00> : vector<8x128xf32>
    %10 = tpu.matmul %8, %9, %cst_8 {dimension_numbers = #tpu.dot_dimension_numbers<[1], [0], [0], [1], [0, 0, 1, 1], [], []>} : vector<8x128xbf16>, vector<128x128xbf16>, vector<8x128xf32> -> vector<8x128xf32>
    %c0_9 = arith.constant 0 : index
    %c0_10 = arith.constant 0 : index
    %11 = vector.load %arg5[%c0_9, %c0_10] : memref<1x128xf32, #tpu.memory_space<vmem>>, vector<1x128xf32>
    %12 = vector.broadcast %11 : vector<1x128xf32> to vector<8x128xf32>
    %13 = arith.addf %10, %12 : vector<8x128xf32>
    %c0_11 = arith.constant 0 : index
    %c0_12 = arith.constant 0 : index
    %14 = vector.load %arg6[%c0_11, %c0_12] : memref<8x128xf32, #tpu.memory_space<vmem>>, vector<8x128xf32>
    tpu.vector_store %arg6[%c0_11, %c0_12], %13 {strides = array<i32>} : memref<8x128xf32, #tpu.memory_space<vmem>>, vector<8x128xf32>,
    return
  }
  func.func @transform_0(%arg0: i32) -> (i32, i32) {
    %c0_i32 = arith.constant 0 : i32
    %c0_i32_0 = arith.constant 0 : i32
    return %arg0, %c0_i32 : i32, i32
  }
  func.func @transform_1(%arg0: i32) -> (i32, i32) {
    %c0_i32 = arith.constant 0 : i32
    %c0_i32_0 = arith.constant 0 : i32
    %c0_i32_1 = arith.constant 0 : i32
    return %c0_i32, %c0_i32_0 : i32, i32
  }
  func.func @transform_2(%arg0: i32) -> (i32, i32) {
    %c0_i32 = arith.constant 0 : i32
    %c0_i32_0 = arith.constant 0 : i32
    %c0_i32_1 = arith.constant 0 : i32
    return %c0_i32, %c0_i32_0 : i32, i32
  }
  func.func @transform_3(%arg0: i32) -> (i32, i32) {
    %c0_i32 = arith.constant 0 : i32
    %c0_i32_0 = arith.constant 0 : i32
    %c0_i32_1 = arith.constant 0 : i32
    return %c0_i32, %c0_i32_0 : i32, i32
  }
  func.func @transform_4(%arg0: i32) -> (i32, i32) {
    %c0_i32 = arith.constant 0 : i32
    %c0_i32_0 = arith.constant 0 : i32
    %c0_i32_1 = arith.constant 0 : i32
    return %c0_i32, %c0_i32_0 : i32, i32
  }
  func.func @transform_5(%arg0: i32) -> (i32, i32) {
    %c0_i32 = arith.constant 0 : i32
    %c0_i32_0 = arith.constant 0 : i32
    return %arg0, %c0_i32 : i32, i32
  }
}

</mosaic_0001>

<llo_original>
// kernel: network_forward.1
$region0: #{network_forward.1}
  #allocation0 [shape = 'u32[]', space=smem, size = 0x4, offset = 0x4, fixed_abs, tag = 'smem constant byte address 0x4 - core index']
  #allocation1 [shape = 'u32[72,128]{1,0:T(1,128)}', space=vmem, size = 0x9000, scoped, tag = 'internal scratch']
  %s0 = inlined_call_operand.vmem [shape: bf16[8,32], index: 0, kind: input, shape index: {}]
  %s1 = inlined_call_operand.vmem [shape: bf16[32,128], index: 1, kind: input, shape index: {}]
  %s2 = inlined_call_operand.vmem [shape: f32[1,128], index: 2, kind: input, shape index: {}]
  %s3 = inlined_call_operand.vmem [shape: bf16[128,128], index: 3, kind: input, shape index: {}]
  %s4 = inlined_call_operand.vmem [shape: f32[1,128], index: 4, kind: input, shape index: {}]
  %s5 = inlined_call_operand.hbm [shape: f32[8,128], index: 5, kind: output, shape index: {}]
  %s6 = sld [smem:[#allocation0]]
  $region30: #{network_forward.1} parent=0
    _
  %s8 = ssub.s32 1, %s6
  %s9 = scalar_select 0, %s8, %s6
  $region1: #{network_forward.1} parent=0
    #allocation2 [shape = 'u8[4096]{0}', space=vmem, size = 0x1000, scoped, tag = 'output window, operand 0, single buffered']
    #allocation3 [shape = 's32[1]{0}', space=sflag, size = 0x4, scoped, tag = 'scoped memory for network_forward.1']
    %10 = vsyncpa [#allocation3], 0
    // Predicated region
    $region2: #{network_forward.1} parent=1 // pred_check
      _
    $region3: #{network_forward.1} parent=1 // pred_check_branch
      %12 = sbr.rel (0) target = $region5
    $region4: #{network_forward.1} parent=1 // pred_region
      _
    $region5: #{network_forward.1} parent=1 // pred_fallthru
      _
    // Predicated region
    $region6: #{network_forward.1} parent=1 // pred_check
      _
    $region7: #{network_forward.1} parent=1 // pred_check_branch
      %14 = sbr.rel (0) target = $region9
    $region8: #{network_forward.1} parent=1 // pred_region
      _
    $region9: #{network_forward.1} parent=1 // pred_fallthru
      _
    // Predicated region
    $region10: #{network_forward.1} parent=1 // pred_check
      _
    $region11: #{network_forward.1} parent=1 // pred_check_branch
      %16 = sbr.rel (0) target = $region13
    $region12: #{network_forward.1} parent=1 // pred_region
      _
    $region13: #{network_forward.1} parent=1 // pred_fallthru
      _
    // Predicated region
    $region14: #{network_forward.1} parent=1 // pred_check
      _
    $region15: #{network_forward.1} parent=1 // pred_check_branch
      %18 = sbr.rel (0) target = $region17
    $region16: #{network_forward.1} parent=1 // pred_region
      _
    $region17: #{network_forward.1} parent=1 // pred_fallthru
      _
    // Predicated region
    $region18: #{network_forward.1} parent=1 // pred_check
      _
    $region19: #{network_forward.1} parent=1 // pred_check_branch
      %20 = sbr.rel (0) target = $region21
    $region20: #{network_forward.1} parent=1 // pred_region
      _
    $region21: #{network_forward.1} parent=1 // pred_fallthru
      _
    %v22 = vld [vmem:[%s0] sm:$0xf]
    %v23 = vld [vmem:[%s1] sm:$0xf]
    %v24 = vld [vmem:[%s1 + $0x4] sm:$0xf]
    %v25 = vld [vmem:[%s1 + $0x8] sm:$0xf]
    %v26 = vld [vmem:[%s1 + $0xc] sm:$0xf]
    %v27 = vld [vmem:[%s2] sm:$0x1]
    %v29 = vperm.slane %v27, 0
    %v35 = vunpack.c.l.b16 %v23
    %v36 = vunpack.c.l.b16 %v24
    %v37 = vunpack.c.l.b16 %v25
    %v38 = vunpack.c.l.b16 %v26
    %v39 = vpack.c.b16 %v36, %v35
    %v40 = vpack.c.b16 %v38, %v37
    %vm43 = vcmask 261120
    %v45 = vsel %vm43, %v22, 0
    %47 = vmatpush.bf16.msra.mxu0 0
    %48 = vmatpush.bf16.msra.mxu0 0
    %49 = vmatpush.bf16.msra.mxu0 0
    %50 = vmatpush.bf16.msra.mxu0 0
    %51 = vmatpush.bf16.msra.mxu0 0
    %52 = vmatpush.bf16.msra.mxu0 0
    %53 = vmatpush.bf16.msra.mxu0 %v40
    %54 = vmatpush.bf16.msra.mxu0 %v39
    %55 = vmatmul.bf16.gmra.mxu0 %v45
    %v56 = vpop.f32.mrf.mxu0
    %v57 = vadd.f32 %v29, %v56
    %v58 = vpop.f32.mrf.mxu0
    %59 = vdwg.mxu0
    %v60 = vmax.f32 %v57, 0.0
    %v61 = vpack.c.bf16 %v60, %v60
    %v62 = vld [vmem:[%s3] sm:$0xf]
    %v63 = vld [vmem:[%s3 + $0x4] sm:$0xf]
    %v64 = vld [vmem:[%s3 + $0x8] sm:$0xf]
    %v65 = vld [vmem:[%s3 + $0xc] sm:$0xf]
    %v66 = vld [vmem:[%s3 + $0x10] sm:$0xf]
    %v67 = vld [vmem:[%s3 + $0x14] sm:$0xf]
    %v68 = vld [vmem:[%s3 + $0x18] sm:$0xf]
    %v69 = vld [vmem:[%s3 + $0x1c] sm:$0xf]
    %v70 = vld [vmem:[%s3 + $0x20] sm:$0xf]
    %v71 = vld [vmem:[%s3 + $0x24] sm:$0xf]
    %v72 = vld [vmem:[%s3 + $0x28] sm:$0xf]
    %v73 = vld [vmem:[%s3 + $0x2c] sm:$0xf]
    %v74 = vld [vmem:[%s3 + $0x30] sm:$0xf]
    %v75 = vld [vmem:[%s3 + $0x34] sm:$0xf]
    %v76 = vld [vmem:[%s3 + $0x38] sm:$0xf]
    %v77 = vld [vmem:[%s3 + $0x3c] sm:$0xf]
    %v78 = vld [vmem:[%s4] sm:$0x1]
    %v80 = vperm.slane %v78, 0
    %v98 = vunpack.c.l.b16 %v62
    %v99 = vunpack.c.l.b16 %v63
    %v100 = vunpack.c.l.b16 %v64
    %v101 = vunpack.c.l.b16 %v65
    %v102 = vunpack.c.l.b16 %v66
    %v103 = vunpack.c.l.b16 %v67
    %v104 = vunpack.c.l.b16 %v68
    %v105 = vunpack.c.l.b16 %v69
    %v106 = vunpack.c.l.b16 %v70
    %v107 = vunpack.c.l.b16 %v71
    %v108 = vunpack.c.l.b16 %v72
    %v109 = vunpack.c.l.b16 %v73
    %v110 = vunpack.c.l.b16 %v74
    %v111 = vunpack.c.l.b16 %v75
    %v112 = vunpack.c.l.b16 %v76
    %v113 = vunpack.c.l.b16 %v77
    %v114 = vpack.c.b16 %v99, %v98
    %v115 = vpack.c.b16 %v101, %v100
    %v116 = vpack.c.b16 %v103, %v102
    %v117 = vpack.c.b16 %v105, %v104
    %v118 = vpack.c.b16 %v107, %v106
    %v119 = vpack.c.b16 %v109, %v108
    %v120 = vpack.c.b16 %v111, %v110
    %v121 = vpack.c.b16 %v113, %v112
    %130 = vmatpush.bf16.msra.mxu0 %v121
    %131 = vmatpush.bf16.msra.mxu0 %v120
    %132 = vmatpush.bf16.msra.mxu0 %v119
    %133 = vmatpush.bf16.msra.mxu0 %v118
    %134 = vmatpush.bf16.msra.mxu0 %v117
    %135 = vmatpush.bf16.msra.mxu0 %v116
    %136 = vmatpush.bf16.msra.mxu0 %v115
    %137 = vmatpush.bf16.msra.mxu0 %v114
    %138 = vmatmul.bf16.gmra.mxu0 %v61
    %v139 = vpop.f32.mrf.mxu0
    %v140 = vadd.f32 %v80, %v139
    %v141 = vpop.f32.mrf.mxu0
    %142 = vdwg.mxu0
    %143 = vst [vmem:[#allocation2] sm:$0xff] %v140
    // Predicated region
    $region22: #{network_forward.1} parent=1 // pred_check
      _
    $region23: #{network_forward.1} parent=1 // pred_check_branch
      %145 = sbr.rel (0) target = $region25
    $region24: #{network_forward.1} parent=1 // pred_region
      %147 = vsyncadd [#allocation3], 0
      %s149 = sshll.u32 [#allocation2], 4
      %s150 = int_to_ptr.vmem [resolvable:$true] %s149
      %s151 = sshll.u32 %s5, 4
      %s152 = int_to_ptr.hbm [resolvable:$true] %s151
      %154 = dma.vmem_to_hbm [thread:$0]  %s150, 128, %s152, [#allocation3]
    $region25: #{network_forward.1} parent=1 // pred_fallthru
      _
    // Predicated region
    $region26: #{network_forward.1} parent=1 // pred_check
      _
    $region27: #{network_forward.1} parent=1 // pred_check_branch
      %156 = sbr.rel (0) target = $region29
    $region28: #{network_forward.1} parent=1 // pred_region
      %158 = dma.done [#allocation3], 128
    $region29: #{network_forward.1} parent=1 // pred_fallthru
      _
    %159 = vsyncpa [#allocation3], 1

</llo_original>
